<compile_context>
chip_gen: v5e
topology: v5e:2x2
jax: 0.10.0
libtpu: 0.0.40
codegen_flags: <defaults>
</compile_context>

<pallas_src>
import functools

import jax
import jax.numpy as jnp
from jax import lax
from jax.experimental import pallas as pl
from jax.experimental.pallas import tpu as pltpu


def _round_up(n, m):
    return ((n + m - 1) // m) * m


def _mnd_kernel(x_ref, w1_ref, b1_ref, w2_ref, b2_ref, wh_ref, bh_ref,
                out_ref, *, out_dim, clip_logstd, mu_act_fn):
    cdt = w1_ref.dtype
    # Cast the x tile in-kernel (no separate wrapper-side astype pass over HBM).
    x = x_ref[...].astype(cdt)

    # Hidden layer 1: MXU matmul, f32 accumulate; bias + ReLU in f32 (VPU).
    h1 = jnp.dot(x, w1_ref[...], preferred_element_type=jnp.float32)
    h1 = jnp.maximum(h1 + b1_ref[...], 0.0)

    # Hidden layer 2.
    h2 = jnp.dot(h1.astype(cdt), w2_ref[...], preferred_element_type=jnp.float32)
    h2 = jnp.maximum(h2 + b2_ref[...], 0.0)

    # Combined head: single matmul producing mu || logstd (|| zero-pad lanes).
    head = jnp.dot(h2.astype(cdt), wh_ref[...], preferred_element_type=jnp.float32)
    head = head + bh_ref[...]

    # Lane mask selecting the logstd lanes [out_dim, 2*out_dim).
    lane = lax.broadcasted_iota(jnp.int32, head.shape, 1)
    is_logstd = (lane >= out_dim) & (lane < 2 * out_dim)

    logstd = head
    if clip_logstd is not None:
        logstd = jnp.clip(logstd, float(clip_logstd[0]), float(clip_logstd[1]))
    std = jnp.exp(logstd)                                  # EUP
    mu = mu_act_fn(head) if mu_act_fn is not None else head

    # Single lane-dense store of the combined (tb, n_head) slab.
    out_ref[...] = jnp.where(is_logstd, std, mu).astype(out_ref.dtype)


def init_params(key, input_dim, out_dim, hidden_dims=(128, 128)):
    """PyTorch-Linear-like init (uniform +-1/sqrt(fan_in)), W as (in, out)."""
    layer_dims = [input_dim] + list(hidden_dims) + [out_dim * 2]
    params = []
    for t in range(len(layer_dims) - 1):
        fan_in, fan_out = layer_dims[t], layer_dims[t + 1]
        key, kw, kb = jax.random.split(key, 3)
        bound = 1.0 / (fan_in ** 0.5)
        w = jax.random.uniform(kw, (fan_in, fan_out), jnp.float32, -bound, bound)
        b = jax.random.uniform(kb, (1, fan_out), jnp.float32, -bound, bound)
        params.append((w, b))
    return params


def prepare_params(params, out_dim, *, compute_dtype=jnp.bfloat16,
                   lane_dense=True):
    """One-time (cacheable) weight prep: head concat/pad + operand dtype cast.

    Hoisting this out of the forward call removes per-call weight copies.
    Biases stay f32 (added after the f32 MXU accumulation).
    """
    (w1, b1), (w2, b2), (w3, b3) = params
    n_raw = 2 * out_dim
    assert w3.shape[1] == n_raw and b3.shape[1] == n_raw
    # Lane-dense head: pad mu||logstd columns up to a multiple of 128 so the
    # output stores are unmasked full-lane vst (biggest measured lever for
    # narrow outputs).  Padding columns/bias are zero; their lanes are sliced
    # off in the wrapper.
    n_head = _round_up(n_raw, 128) if (lane_dense and n_raw % 128 != 0) else n_raw
    pad = n_head - n_raw
    w_head = jnp.pad(w3, ((0, 0), (0, pad))) if pad else w3
    b_head = jnp.pad(b3, ((0, 0), (0, pad))) if pad else b3
    if compute_dtype is not None:
        w1 = w1.astype(compute_dtype)
        w2 = w2.astype(compute_dtype)
        w_head = w_head.astype(compute_dtype)
    return dict(w1=w1, b1=b1, w2=w2, b2=b2, w_head=w_head, b_head=b_head,
                out_dim=out_dim, n_head=n_head)


def multivariate_normal_distribution_forward(x, params, out_dim, *,
                                              mu_act_fn=None, clip_logstd=None,
                                              compute_dtype=jnp.bfloat16,
                                              lane_dense=True,
                                              tile_b=1024, min_grid_steps=2):
    """Returns ((mu, std), (mu, std)) mirroring torch's (dist, (mu, std)).

    TODO(synk): torch.distributions.Independent(Normal(mu, std), 1) has no JAX
    Pallas equivalent; the distribution is represented by its (mu, std) params.
    TODO(synk): the fixed_std path of the original module is not implemented.

    `params` may be the raw list of (W, b) pairs or the dict returned by
    prepare_params() (preferred for repeated calls).
    compute_dtype: MXU operand dtype (default bf16; accumulation and all
      elementwise math stay f32).  Pass None for pure-f32 operands.
    tile_b: batch tile size (rounded up to a multiple of 8); sweep 512-2048
      (256-1024 on v5e).
    min_grid_steps: lower bound on grid steps so the "parallel" batch axis can
      shard across both TensorCores on v7x (neutral on v5e/v6e).
    """
    if not isinstance(params, dict):
        params = prepare_params(params, out_dim, compute_dtype=compute_dtype,
                                lane_dense=lane_dense)
    assert params["out_dim"] == out_dim
    w1, b1 = params["w1"], params["b1"]
    w2, b2 = params["w2"], params["b2"]
    wh, bh = params["w_head"], params["b_head"]
    n_head = params["n_head"]

    B, input_dim = x.shape
    hidden1, hidden2 = w1.shape[1], w2.shape[1]

    # Batch tile: multiple of 8 (required by the (8,128) tiling rule), no
    # larger than the (rounded) batch, and split so we get >= min_grid_steps
    # grid steps whenever the batch allows it (v7x dual-TC utilization).
    tb = _round_up(min(int(tile_b), _round_up(B, 8)), 8)
    if min_grid_steps > 1:
        tb_split = _round_up(pl.cdiv(_round_up(B, 8), min_grid_steps), 8)
        if pl.cdiv(B, tb_split) >= min_grid_steps:
            tb = min(tb, tb_split)
    grid = (pl.cdiv(B, tb),)   # ragged tail handled by Pallas partial blocks

    def _const(a):  # whole-array block, constant index -> VMEM-resident
        return pl.BlockSpec(a.shape, lambda i: (0, 0))

    flops = 2 * B * (input_dim * hidden1 + hidden1 * hidden2 + hidden2 * n_head)
    transcendentals = B * n_head * (2 if mu_act_fn is not None else 1)
    bytes_accessed = int(
        x.size * x.dtype.itemsize
        + sum(int(a.size) * a.dtype.itemsize for a in (w1, b1, w2, b2, wh, bh))
        + B * n_head * 4)

    # Rough VMEM footprint (double-buffered blocks + f32 intermediates); only
    # raise the scoped limit when the 32 MiB default would be exceeded.
    vmem_est = (2 * sum(int(a.size) * a.dtype.itemsize
                        for a in (w1, b1, w2, b2, wh, bh))
                + 2 * tb * (input_dim * x.dtype.itemsize + n_head * 4)
                + 4 * tb * (hidden1 + hidden2 + n_head) * 4)
    cp_kwargs = dict(dimension_semantics=("parallel",))
    if vmem_est > (32 << 20):
        cp_kwargs["vmem_limit_bytes"] = min(int(vmem_est * 5 // 4), 128 << 20)

    kernel = functools.partial(_mnd_kernel, out_dim=out_dim,
                               clip_logstd=clip_logstd, mu_act_fn=mu_act_fn)

    out = pl.pallas_call(
        kernel,
        grid=grid,
        in_specs=[
            pl.BlockSpec((tb, input_dim), lambda i: (i, 0)),   # x: batch-tiled
            _const(w1), _const(b1),                            # weights resident
            _const(w2), _const(b2),
            _const(wh), _const(bh),
        ],
        out_specs=pl.BlockSpec((tb, n_head), lambda i: (i, 0)),
        out_shape=jax.ShapeDtypeStruct((B, n_head), jnp.float32),  # exact B
        compiler_params=pltpu.CompilerParams(**cp_kwargs),
        cost_estimate=pl.CostEstimate(flops=flops,
                                      transcendentals=transcendentals,
                                      bytes_accessed=bytes_accessed),
    )(x, w1, b1, w2, b2, wh, bh)

    mu = out[:, :out_dim]                 # cheap XLA slices of a small slab
    std = out[:, out_dim:2 * out_dim]
    dist_params = (mu, std)  # stands in for torch.distributions.Independent(Normal(...), 1)
    return dist_params, (mu, std)


def reference_forward(x, params, out_dim, mu_act_fn=None, clip_logstd=None):
    (w1, b1), (w2, b2), (w3, b3) = params
    h1 = jnp.maximum(x @ w1 + b1, 0.0)
    h2 = jnp.maximum(h1 @ w2 + b2, 0.0)
    out = h2 @ w3 + b3
    mu, logstd = out[:, :out_dim], out[:, out_dim:]
    if clip_logstd is not None:
        logstd = jnp.clip(logstd, clip_logstd[0], clip_logstd[1])
    if mu_act_fn is not None:
        mu = mu_act_fn(mu)
    return mu, jnp.exp(logstd)


if __name__ == "__main__":
    key = jax.random.PRNGKey(0)
    k_x, k_p, k_x2 = jax.random.split(key, 3)

    batch, input_dim, out_dim = 8, 32, 8
    hidden_dims = (128, 128)

    x = jax.random.normal(k_x, (batch, input_dim), jnp.float32)
    params = init_params(k_p, input_dim, out_dim, hidden_dims)
    mu_r, std_r = reference_forward(x, params, out_dim)

    # 1) f32 operands, lane-dense combined head, single grid step.
    _, (mu, std) = multivariate_normal_distribution_forward(
        x, params, out_dim, compute_dtype=None)
    jax.block_until_ready((mu, std))
    assert mu.shape == (batch, out_dim) and std.shape == (batch, out_dim)
    assert jnp.allclose(mu, mu_r, atol=1e-5, rtol=1e-5), "mu mismatch (f32)"
    assert jnp.allclose(std, std_r, atol=1e-5, rtol=1e-5), "std mismatch (f32)"

    # 2) Ragged batch (B=200) + fused clip/tanh + small tile -> 4 grid steps,
    #    exercising Pallas partial-block reads/writes (no wrapper-side pad).
    xb = jax.random.normal(k_x2, (200, input_dim), jnp.float32)
    clip = (-5.0, 2.0)
    _, (mu2, std2) = multivariate_normal_distribution_forward(
        xb, params, out_dim, mu_act_fn=jnp.tanh, clip_logstd=clip,
        compute_dtype=None, tile_b=64)
    jax.block_until_ready((mu2, std2))
    mu2_r, std2_r = reference_forward(xb, params, out_dim, jnp.tanh, clip)
    assert jnp.allclose(mu2, mu2_r, atol=1e-5, rtol=1e-5), "mu mismatch (grid)"
    assert jnp.allclose(std2, std2_r, atol=1e-5, rtol=1e-5), "std mismatch (grid)"

    # 3) Default fast path: bf16 MXU operands (f32 accumulate/elementwise),
    #    prepared-params reuse, and min_grid_steps=2 splitting the batch.
    prep = prepare_params(params, out_dim)     # cache once, reuse across calls
    _, (mu3, std3) = multivariate_normal_distribution_forward(
        xb, prep, out_dim, mu_act_fn=jnp.tanh, clip_logstd=clip)
    jax.block_until_ready((mu3, std3))
    assert jnp.allclose(mu3, mu2_r, atol=5e-2, rtol=5e-2), "mu mismatch (bf16)"
    assert jnp.allclose(std3, std2_r, atol=5e-2, rtol=5e-2), "std mismatch (bf16)"

    # 4) Non-lane-dense output path (last dim = 2*out_dim) for coverage.
    _, (mu4, std4) = multivariate_normal_distribution_forward(
        x, params, out_dim, compute_dtype=None, lane_dense=False)
    jax.block_until_ready((mu4, std4))
    assert jnp.allclose(mu4, mu_r, atol=1e-5, rtol=1e-5), "mu mismatch (narrow)"
    assert jnp.allclose(std4, std_r, atol=1e-5, rtol=1e-5), "std mismatch (narrow)"

    print("KERNEL_OK")
</pallas_src>

<mosaic_0001>
module attributes {stable_mosaic.version = 11 : i64} {
  func.func @_mnd_kernel(%arg0: i32, %arg1: memref<8x32xf32, #tpu.memory_space<vmem>>, %arg2: memref<32x128xf32, #tpu.memory_space<vmem>>, %arg3: memref<1x128xf32, #tpu.memory_space<vmem>>, %arg4: memref<128x128xf32, #tpu.memory_space<vmem>>, %arg5: memref<1x128xf32, #tpu.memory_space<vmem>>, %arg6: memref<128x128xf32, #tpu.memory_space<vmem>>, %arg7: memref<1x128xf32, #tpu.memory_space<vmem>>, %arg8: memref<8x128xf32, #tpu.memory_space<vmem>>) attributes {dimension_semantics = [#tpu.dimension_semantics<parallel>], iteration_bounds = array<i64: 1>, scalar_prefetch = 0 : i64, scratch_operands = 0 : i64, tpu.core_type = #tpu.core_type<tc>, window_params = [{transform_indices = @transform_0, window_bounds = array<i64: 8, 32>}, {pipeline_mode = #tpu.pipeline_mode<synchronous>, transform_indices = @transform_1, window_bounds = array<i64: 32, 128>}, {pipeline_mode = #tpu.pipeline_mode<synchronous>, transform_indices = @transform_2, window_bounds = array<i64: 1, 128>}, {pipeline_mode = #tpu.pipeline_mode<synchronous>, transform_indices = @transform_3, window_bounds = array<i64: 128, 128>}, {pipeline_mode = #tpu.pipeline_mode<synchronous>, transform_indices = @transform_4, window_bounds = array<i64: 1, 128>}, {pipeline_mode = #tpu.pipeline_mode<synchronous>, transform_indices = @transform_5, window_bounds = array<i64: 128, 128>}, {pipeline_mode = #tpu.pipeline_mode<synchronous>, transform_indices = @transform_6, window_bounds = array<i64: 1, 128>}, {transform_indices = @transform_7, window_bounds = array<i64: 8, 128>}]} {
    %c0 = arith.constant 0 : index
    %c0_0 = arith.constant 0 : index
    %0 = vector.load %arg1[%c0, %c0_0] : memref<8x32xf32, #tpu.memory_space<vmem>>, vector<8x32xf32>
    %c0_1 = arith.constant 0 : index
    %c0_2 = arith.constant 0 : index
    %1 = vector.load %arg2[%c0_1, %c0_2] : memref<32x128xf32, #tpu.memory_space<vmem>>, vector<32x128xf32>
    %cst = arith.constant dense<0.000000e+00> : vector<8x128xf32>
    %2 = tpu.matmul %0, %1, %cst {dimension_numbers = #tpu.dot_dimension_numbers<[1], [0], [0], [1], [0, 0, 1, 1], [], []>} : vector<8x32xf32>, vector<32x128xf32>, vector<8x128xf32> -> vector<8x128xf32>
    %c0_3 = arith.constant 0 : index
    %c0_4 = arith.constant 0 : index
    %3 = vector.load %arg3[%c0_3, %c0_4] : memref<1x128xf32, #tpu.memory_space<vmem>>, vector<1x128xf32>
    %4 = vector.broadcast %3 : vector<1x128xf32> to vector<8x128xf32>
    %5 = arith.addf %2, %4 : vector<8x128xf32>
    %cst_5 = arith.constant 0.000000e+00 : f32
    %6 = vector.broadcast %cst_5 : f32 to vector<8x128xf32>
    %7 = arith.maximumf %5, %6 : vector<8x128xf32>
    %c0_6 = arith.constant 0 : index
    %c0_7 = arith.constant 0 : index
    %8 = vector.load %arg4[%c0_6, %c0_7] : memref<128x128xf32, #tpu.memory_space<vmem>>, vector<128x128xf32>
    %cst_8 = arith.constant dense<0.000000e+00> : vector<8x128xf32>
    %9 = tpu.matmul %7, %8, %cst_8 {dimension_numbers = #tpu.dot_dimension_numbers<[1], [0], [0], [1], [0, 0, 1, 1], [], []>} : vector<8x128xf32>, vector<128x128xf32>, vector<8x128xf32> -> vector<8x128xf32>
    %c0_9 = arith.constant 0 : index
    %c0_10 = arith.constant 0 : index
    %10 = vector.load %arg5[%c0_9, %c0_10] : memref<1x128xf32, #tpu.memory_space<vmem>>, vector<1x128xf32>
    %11 = vector.broadcast %10 : vector<1x128xf32> to vector<8x128xf32>
    %12 = arith.addf %9, %11 : vector<8x128xf32>
    %cst_11 = arith.constant 0.000000e+00 : f32
    %13 = vector.broadcast %cst_11 : f32 to vector<8x128xf32>
    %14 = arith.maximumf %12, %13 : vector<8x128xf32>
    %c0_12 = arith.constant 0 : index
    %c0_13 = arith.constant 0 : index
    %15 = vector.load %arg6[%c0_12, %c0_13] : memref<128x128xf32, #tpu.memory_space<vmem>>, vector<128x128xf32>
    %cst_14 = arith.constant dense<0.000000e+00> : vector<8x128xf32>
    %16 = tpu.matmul %14, %15, %cst_14 {dimension_numbers = #tpu.dot_dimension_numbers<[1], [0], [0], [1], [0, 0, 1, 1], [], []>} : vector<8x128xf32>, vector<128x128xf32>, vector<8x128xf32> -> vector<8x128xf32>
    %c0_15 = arith.constant 0 : index
    %c0_16 = arith.constant 0 : index
    %17 = vector.load %arg7[%c0_15, %c0_16] : memref<1x128xf32, #tpu.memory_space<vmem>>, vector<1x128xf32>
    %18 = vector.broadcast %17 : vector<1x128xf32> to vector<8x128xf32>
    %19 = arith.addf %16, %18 : vector<8x128xf32>
    %20 = tpu.iota {dimensions = array<i32: 1>} : vector<8x128xi32>
    %c8_i32 = arith.constant 8 : i32
    %21 = vector.broadcast %c8_i32 : i32 to vector<8x128xi32>
    %22 = arith.cmpi sge, %20, %21 : vector<8x128xi32>
    %c16_i32 = arith.constant 16 : i32
    %23 = vector.broadcast %c16_i32 : i32 to vector<8x128xi32>
    %24 = arith.cmpi slt, %20, %23 : vector<8x128xi32>
    %25 = arith.andi %22, %24 : vector<8x128xi1>
    %26 = math.exp %19 : vector<8x128xf32>
    %27 = arith.select %25, %26, %19 : vector<8x128xi1>, vector<8x128xf32>
    %c0_17 = arith.constant 0 : index
    %c0_18 = arith.constant 0 : index
    %28 = vector.load %arg8[%c0_17, %c0_18] : memref<8x128xf32, #tpu.memory_space<vmem>>, vector<8x128xf32>
    tpu.vector_store %arg8[%c0_17, %c0_18], %27 {strides = array<i32>} : memref<8x128xf32, #tpu.memory_space<vmem>>, vector<8x128xf32>,
    return
  }
  func.func @transform_0(%arg0: i32) -> (i32, i32) {
    %c0_i32 = arith.constant 0 : i32
    %c0_i32_0 = arith.constant 0 : i32
    return %arg0, %c0_i32 : i32, i32
  }
  func.func @transform_1(%arg0: i32) -> (i32, i32) {
    %c0_i32 = arith.constant 0 : i32
    %c0_i32_0 = arith.constant 0 : i32
    %c0_i32_1 = arith.constant 0 : i32
    return %c0_i32, %c0_i32_0 : i32, i32
  }
  func.func @transform_2(%arg0: i32) -> (i32, i32) {
    %c0_i32 = arith.constant 0 : i32
    %c0_i32_0 = arith.constant 0 : i32
    %c0_i32_1 = arith.constant 0 : i32
    return %c0_i32, %c0_i32_0 : i32, i32
  }
  func.func @transform_3(%arg0: i32) -> (i32, i32) {
    %c0_i32 = arith.constant 0 : i32
    %c0_i32_0 = arith.constant 0 : i32
    %c0_i32_1 = arith.constant 0 : i32
    return %c0_i32, %c0_i32_0 : i32, i32
  }
  func.func @transform_4(%arg0: i32) -> (i32, i32) {
    %c0_i32 = arith.constant 0 : i32
    %c0_i32_0 = arith.constant 0 : i32
    %c0_i32_1 = arith.constant 0 : i32
    return %c0_i32, %c0_i32_0 : i32, i32
  }
  func.func @transform_5(%arg0: i32) -> (i32, i32) {
    %c0_i32 = arith.constant 0 : i32
    %c0_i32_0 = arith.constant 0 : i32
    %c0_i32_1 = arith.constant 0 : i32
    return %c0_i32, %c0_i32_0 : i32, i32
  }
  func.func @transform_6(%arg0: i32) -> (i32, i32) {
    %c0_i32 = arith.constant 0 : i32
    %c0_i32_0 = arith.constant 0 : i32
    %c0_i32_1 = arith.constant 0 : i32
    return %c0_i32, %c0_i32_0 : i32, i32
  }
  func.func @transform_7(%arg0: i32) -> (i32, i32) {
    %c0_i32 = arith.constant 0 : i32
    %c0_i32_0 = arith.constant 0 : i32
    return %arg0, %c0_i32 : i32, i32
  }
}

</mosaic_0001>

<llo_original>
// kernel: tpu_custom_call.1
$region0: #{tpu_custom_call.1}
  #allocation0 [shape = 'u32[]', space=smem, size = 0x4, offset = 0x4, fixed_abs, tag = 'smem constant byte address 0x4 - core index']
  #allocation1 [shape = 'u32[72,128]{1,0:T(1,128)}', space=vmem, size = 0x9000, scoped, tag = 'internal scratch']
  %s0 = inlined_call_operand.hbm [shape: f32[8,32], index: 0, kind: input, shape index: {}]
  %s1 = inlined_call_operand.hbm [shape: f32[32,128], index: 1, kind: input, shape index: {}]
  %s2 = inlined_call_operand.vmem [shape: f32[1,128], index: 2, kind: input, shape index: {}]
  %s3 = inlined_call_operand.hbm [shape: f32[128,128], index: 3, kind: input, shape index: {}]
  %s4 = inlined_call_operand.vmem [shape: f32[1,128], index: 4, kind: input, shape index: {}]
  %s5 = inlined_call_operand.hbm [shape: f32[128,128], index: 5, kind: input, shape index: {}]
  %s6 = inlined_call_operand.vmem [shape: f32[1,128], index: 6, kind: input, shape index: {}]
  %s7 = inlined_call_operand.hbm [shape: f32[8,128], index: 7, kind: output, shape index: {}]
  %s8 = sld [smem:[#allocation0]]
  $region54: #{tpu_custom_call.1} parent=0
    _
  %s10 = ssub.s32 1, %s8
  %s11 = scalar_select 0, %s10, %s8
  $region1: #{tpu_custom_call.1} parent=0
    #allocation2 [shape = 'u8[4096]{0}', space=vmem, size = 0x1000, scoped, tag = 'input window, operand 0, single buffered']
    #allocation3 [shape = 's32[1]{0}', space=sflag, size = 0x4, scoped, tag = 'scoped memory for tpu_custom_call.1']
    #allocation4 [shape = 's32[1]{0}', space=sflag, size = 0x4, scoped, tag = 'scoped memory for tpu_custom_call.1']
    #allocation5 [shape = 'u8[16384]{0}', space=vmem, size = 0x4000, scoped, tag = 'input window, operand 1, single buffered']
    #allocation6 [shape = 's32[1]{0}', space=sflag, size = 0x4, scoped, tag = 'scoped memory for tpu_custom_call.1']
    #allocation7 [shape = 'u8[65536]{0}', space=vmem, size = 0x10000, scoped, tag = 'input window, operand 3, single buffered']
    #allocation8 [shape = 'u8[65536]{0}', space=vmem, size = 0x10000, scoped, tag = 'input window, operand 5, single buffered']
    #allocation9 [shape = 's32[1]{0}', space=sflag, size = 0x4, scoped, tag = 'scoped memory for tpu_custom_call.1']
    #allocation10 [shape = 'u8[4096]{0}', space=vmem, size = 0x1000, scoped, tag = 'output window, operand 0, single buffered']
    %12 = vsyncpa [#allocation3], 0
    %13 = vsyncpa [#allocation6], 0
    %14 = vsyncpa [#allocation9], 0
    %15 = vsyncpa [#allocation4], 0
    // Predicated region
    $region2: #{tpu_custom_call.1} parent=1 // pred_check
      _
    $region3: #{tpu_custom_call.1} parent=1 // pred_check_branch
      %17 = sbr.rel (0) target = $region5
    $region4: #{tpu_custom_call.1} parent=1 // pred_region
      %19 = vsyncadd [#allocation3], 0
      %s21 = sshll.u32 %s0, 4
      %s22 = int_to_ptr.hbm [resolvable:$true] %s21
      %s23 = sshll.u32 [#allocation2], 4
      %s24 = int_to_ptr.vmem [resolvable:$true] %s23
      %26 = dma.hbm_to_vmem [thread:$0]  %s22, 128, %s24, [#allocation3]
    $region5: #{tpu_custom_call.1} parent=1 // pred_fallthru
      _
    // Predicated region
    $region6: #{tpu_custom_call.1} parent=1 // pred_check
      _
    $region7: #{tpu_custom_call.1} parent=1 // pred_check_branch
      %28 = sbr.rel (0) target = $region9
    $region8: #{tpu_custom_call.1} parent=1 // pred_region
      %30 = vsyncadd [#allocation6], 0
      %s31 = sshll.u32 %s1, 4
      %s32 = int_to_ptr.hbm [resolvable:$true] %s31
      %s33 = sshll.u32 [#allocation5], 4
      %s34 = int_to_ptr.vmem [resolvable:$true] %s33
      %39 = dma.hbm_to_vmem [thread:$0]  %s32, 512, %s34, [#allocation6], 128, 128, 8
    $region9: #{tpu_custom_call.1} parent=1 // pred_fallthru
      _
    // Predicated region
    $region10: #{tpu_custom_call.1} parent=1 // pred_check
      _
    $region11: #{tpu_custom_call.1} parent=1 // pred_check_branch
      %41 = sbr.rel (0) target = $region13
    $region12: #{tpu_custom_call.1} parent=1 // pred_region
      _
    $region13: #{tpu_custom_call.1} parent=1 // pred_fallthru
      _
    // Predicated region
    $region14: #{tpu_custom_call.1} parent=1 // pred_check
      _
    $region15: #{tpu_custom_call.1} parent=1 // pred_check_branch
      %43 = sbr.rel (0) target = $region17
    $region16: #{tpu_custom_call.1} parent=1 // pred_region
      %45 = vsyncadd [#allocation6], 0
      %s46 = sshll.u32 %s3, 4
      %s47 = int_to_ptr.hbm [resolvable:$true] %s46
      %s48 = sshll.u32 [#allocation7], 4
      %s49 = int_to_ptr.vmem [resolvable:$true] %s48
      %54 = dma.hbm_to_vmem [thread:$0]  %s47, 2048, %s49, [#allocation6], 128, 128, 8
    $region17: #{tpu_custom_call.1} parent=1 // pred_fallthru
      _
    // Predicated region
    $region18: #{tpu_custom_call.1} parent=1 // pred_check
      _
    $region19: #{tpu_custom_call.1} parent=1 // pred_check_branch
      %56 = sbr.rel (0) target = $region21
    $region20: #{tpu_custom_call.1} parent=1 // pred_region
      _
    $region21: #{tpu_custom_call.1} parent=1 // pred_fallthru
      _
    // Predicated region
    $region22: #{tpu_custom_call.1} parent=1 // pred_check
      _
    $region23: #{tpu_custom_call.1} parent=1 // pred_check_branch
      %58 = sbr.rel (0) target = $region25
    $region24: #{tpu_custom_call.1} parent=1 // pred_region
      %60 = vsyncadd [#allocation9], 0
      %s61 = sshll.u32 %s5, 4
      %s62 = int_to_ptr.hbm [resolvable:$true] %s61
      %s63 = sshll.u32 [#allocation8], 4
      %s64 = int_to_ptr.vmem [resolvable:$true] %s63
      %69 = dma.hbm_to_vmem [thread:$0]  %s62, 2048, %s64, [#allocation9], 128, 128, 8
    $region25: #{tpu_custom_call.1} parent=1 // pred_fallthru
      _
    // Predicated region
    $region26: #{tpu_custom_call.1} parent=1 // pred_check
      _
    $region27: #{tpu_custom_call.1} parent=1 // pred_check_branch
      %71 = sbr.rel (0) target = $region29
    $region28: #{tpu_custom_call.1} parent=1 // pred_region
      _
    $region29: #{tpu_custom_call.1} parent=1 // pred_fallthru
      _
    // Predicated region
    $region30: #{tpu_custom_call.1} parent=1 // pred_check
      _
    $region31: #{tpu_custom_call.1} parent=1 // pred_check_branch
      %73 = sbr.rel (0) target = $region33
    $region32: #{tpu_custom_call.1} parent=1 // pred_region
      %75 = dma.done [#allocation3], 128
    $region33: #{tpu_custom_call.1} parent=1 // pred_fallthru
      _
    // Predicated region
    $region34: #{tpu_custom_call.1} parent=1 // pred_check
      _
    $region35: #{tpu_custom_call.1} parent=1 // pred_check_branch
      %77 = sbr.rel (0) target = $region37
    $region36: #{tpu_custom_call.1} parent=1 // pred_region
      %79 = dma.done [#allocation6], 512
    $region37: #{tpu_custom_call.1} parent=1 // pred_fallthru
      _
    // Predicated region
    $region38: #{tpu_custom_call.1} parent=1 // pred_check
      _
    $region39: #{tpu_custom_call.1} parent=1 // pred_check_branch
      %81 = sbr.rel (0) target = $region41
    $region40: #{tpu_custom_call.1} parent=1 // pred_region
      %83 = dma.done [#allocation6], 2048
    $region41: #{tpu_custom_call.1} parent=1 // pred_fallthru
      _
    // Predicated region
    $region42: #{tpu_custom_call.1} parent=1 // pred_check
      _
    $region43: #{tpu_custom_call.1} parent=1 // pred_check_branch
      %85 = sbr.rel (0) target = $region45
    $region44: #{tpu_custom_call.1} parent=1 // pred_region
      %87 = dma.done [#allocation9], 2048
    $region45: #{tpu_custom_call.1} parent=1 // pred_fallthru
      _
    %v88 = vld [vmem:[#allocation2] sm:$0xff]
    %v89 = vld [vmem:[#allocation5] sm:$0xff]
    %v90 = vld [vmem:[#allocation5 + $0x8] sm:$0xff]
    %v91 = vld [vmem:[#allocation5 + $0x10] sm:$0xff]
    %v92 = vld [vmem:[#allocation5 + $0x18] sm:$0xff]
    %v93 = vld [vmem:[%s2] sm:$0x1]
    %v95 = vperm.slane %v93, 0
    %vm97 = vcmask 261120
    %v99 = vsel %vm97, %v88, 0
    %101 = vmatpush.msra.mxu0 0.0
    %102 = vmatpush.msra.mxu0 0.0
    %103 = vmatpush.msra.mxu0 0.0
    %104 = vmatpush.msra.mxu0 0.0
    %105 = vmatpush.msra.mxu0 0.0
    %106 = vmatpush.msra.mxu0 0.0
    %107 = vmatpush.msra.mxu0 0.0
    %108 = vmatpush.msra.mxu0 0.0
    %109 = vmatpush.msra.mxu0 0.0
    %110 = vmatpush.msra.mxu0 0.0
    %111 = vmatpush.msra.mxu0 0.0
    %112 = vmatpush.msra.mxu0 0.0
    %113 = vmatpush.msra.mxu0 %v92
    %114 = vmatpush.msra.mxu0 %v91
    %115 = vmatpush.msra.mxu0 %v90
    %116 = vmatpush.msra.mxu0 %v89
    %117 = vmatmul.f32.gmra.mxu0 %v99
    %v118 = vpop.f32.mrf.mxu0
    %v119 = vadd.f32 %v95, %v118
    %120 = vdwg.mxu0
    %v121 = vmax.f32 %v119, 0.0
    %v122 = vld [vmem:[#allocation7] sm:$0xff]
    %v123 = vld [vmem:[#allocation7 + $0x8] sm:$0xff]
    %v124 = vld [vmem:[#allocation7 + $0x10] sm:$0xff]
    %v125 = vld [vmem:[#allocation7 + $0x18] sm:$0xff]
    %v126 = vld [vmem:[#allocation7 + $0x20] sm:$0xff]
    %v127 = vld [vmem:[#allocation7 + $0x28] sm:$0xff]
    %v128 = vld [vmem:[#allocation7 + $0x30] sm:$0xff]
    %v129 = vld [vmem:[#allocation7 + $0x38] sm:$0xff]
    %v130 = vld [vmem:[#allocation7 + $0x40] sm:$0xff]
    %v131 = vld [vmem:[#allocation7 + $0x48] sm:$0xff]
    %v132 = vld [vmem:[#allocation7 + $0x50] sm:$0xff]
    %v133 = vld [vmem:[#allocation7 + $0x58] sm:$0xff]
    %v134 = vld [vmem:[#allocation7 + $0x60] sm:$0xff]
    %v135 = vld [vmem:[#allocation7 + $0x68] sm:$0xff]
    %v136 = vld [vmem:[#allocation7 + $0x70] sm:$0xff]
    %v137 = vld [vmem:[#allocation7 + $0x78] sm:$0xff]
    %v138 = vld [vmem:[%s4] sm:$0x1]
    %v140 = vperm.slane %v138, 0
    %142 = vmatpush.msra.mxu0 %v137
    %143 = vmatpush.msra.mxu0 %v136
    %144 = vmatpush.msra.mxu0 %v135
    %145 = vmatpush.msra.mxu0 %v134
    %146 = vmatpush.msra.mxu0 %v133
    %147 = vmatpush.msra.mxu0 %v132
    %148 = vmatpush.msra.mxu0 %v131
    %149 = vmatpush.msra.mxu0 %v130
    %150 = vmatpush.msra.mxu0 %v129
    %151 = vmatpush.msra.mxu0 %v128
    %152 = vmatpush.msra.mxu0 %v127
    %153 = vmatpush.msra.mxu0 %v126
    %154 = vmatpush.msra.mxu0 %v125
    %155 = vmatpush.msra.mxu0 %v124
    %156 = vmatpush.msra.mxu0 %v123
    %157 = vmatpush.msra.mxu0 %v122
    %158 = vmatmul.f32.gmra.mxu0 %v121
    %v159 = vpop.f32.mrf.mxu0
    %v160 = vadd.f32 %v140, %v159
    %161 = vdwg.mxu0
    %v162 = vmax.f32 %v160, 0.0
    %v163 = vld [vmem:[#allocation8] sm:$0xff]
    %v164 = vld [vmem:[#allocation8 + $0x8] sm:$0xff]
    %v165 = vld [vmem:[#allocation8 + $0x10] sm:$0xff]
    %v166 = vld [vmem:[#allocation8 + $0x18] sm:$0xff]
    %v167 = vld [vmem:[#allocation8 + $0x20] sm:$0xff]
    %v168 = vld [vmem:[#allocation8 + $0x28] sm:$0xff]
    %v169 = vld [vmem:[#allocation8 + $0x30] sm:$0xff]
    %v170 = vld [vmem:[#allocation8 + $0x38] sm:$0xff]
    %v171 = vld [vmem:[#allocation8 + $0x40] sm:$0xff]
    %v172 = vld [vmem:[#allocation8 + $0x48] sm:$0xff]
    %v173 = vld [vmem:[#allocation8 + $0x50] sm:$0xff]
    %v174 = vld [vmem:[#allocation8 + $0x58] sm:$0xff]
    %v175 = vld [vmem:[#allocation8 + $0x60] sm:$0xff]
    %v176 = vld [vmem:[#allocation8 + $0x68] sm:$0xff]
    %v177 = vld [vmem:[#allocation8 + $0x70] sm:$0xff]
    %v178 = vld [vmem:[#allocation8 + $0x78] sm:$0xff]
    %v179 = vld [vmem:[%s6] sm:$0x1]
    %v181 = vperm.slane %v179, 0
    %183 = vmatpush.msra.mxu0 %v178
    %184 = vmatpush.msra.mxu0 %v177
    %185 = vmatpush.msra.mxu0 %v176
    %186 = vmatpush.msra.mxu0 %v175
    %187 = vmatpush.msra.mxu0 %v174
    %188 = vmatpush.msra.mxu0 %v173
    %189 = vmatpush.msra.mxu0 %v172
    %190 = vmatpush.msra.mxu0 %v171
    %191 = vmatpush.msra.mxu0 %v170
    %192 = vmatpush.msra.mxu0 %v169
    %193 = vmatpush.msra.mxu0 %v168
    %194 = vmatpush.msra.mxu0 %v167
    %195 = vmatpush.msra.mxu0 %v166
    %196 = vmatpush.msra.mxu0 %v165
    %197 = vmatpush.msra.mxu0 %v164
    %198 = vmatpush.msra.mxu0 %v163
    %199 = vmatmul.f32.gmra.mxu0 %v162
    %v200 = vpop.f32.mrf.mxu0
    %v201 = vadd.f32 %v181, %v200
    %202 = vdwg.mxu0
    %v203 = vlaneseq
    %v204 = vand.u32 %v203, 127
    %vm205 = vcmp.ge.s32.totalorder %v204, 8
    %vm206 = vcmp.lt.s32.totalorder %v204, 16
    %vm207 = vmand %vm205, %vm206
    %v208 = vmul.f32 %v201, 1.442695
    %v209 = vpow.pop %v208
    %v210 = vsel %vm207, %v209, %v201
    %211 = vst [vmem:[#allocation10] sm:$0xff] %v210
    // Predicated region
    $region46: #{tpu_custom_call.1} parent=1 // pred_check
      _
    $region47: #{tpu_custom_call.1} parent=1 // pred_check_branch
      %213 = sbr.rel (0) target = $region49
    $region48: #{tpu_custom_call.1} parent=1 // pred_region
      %215 = vsyncadd [#allocation4], 0
      %s217 = sshll.u32 [#allocation10], 4
      %s218 = int_to_ptr.vmem [resolvable:$true] %s217
      %s219 = sshll.u32 %s7, 4
      %s220 = int_to_ptr.hbm [resolvable:$true] %s219
      %222 = dma.vmem_to_hbm [thread:$0]  %s218, 128, %s220, [#allocation4]
    $region49: #{tpu_custom_call.1} parent=1 // pred_fallthru
      _
    // Predicated region
    $region50: #{tpu_custom_call.1} parent=1 // pred_check
      _
    $region51: #{tpu_custom_call.1} parent=1 // pred_check_branch
      %224 = sbr.rel (0) target = $region53
    $region52: #{tpu_custom_call.1} parent=1 // pred_region
      %226 = dma.done [#allocation4], 128
    $region53: #{tpu_custom_call.1} parent=1 // pred_fallthru
      _
    %227 = vsyncpa [#allocation3], 1
    %228 = vsyncpa [#allocation6], 1
    %229 = vsyncpa [#allocation9], 1
    %230 = vsyncpa [#allocation4], 1

</llo_original>
